<compile_context>
chip_gen: v6e
topology: v6e:2x2x1
jax: 0.10.0
libtpu: 0.0.40
codegen_flags: <defaults>
</compile_context>

<pallas_src>
import jax
import jax.numpy as jnp
from jax import lax
from jax.experimental import pallas as pl
from jax.experimental.pallas import tpu as pltpu


def _round_up(x, m):
    return ((x + m - 1) // m) * m


def _fused_patch_embed_kernel(x_ref, w_ref, b_ref, o_ref):
    # x_ref: (TN, Kp)   lane-dense patch rows (model dtype)
    # w_ref: (Kp, Ep)   fused depthwise*pointwise weight (model dtype)
    # b_ref: (1,  Ep)   fused bias (f32)
    # o_ref: (TN, Ep)
    acc = jnp.dot(x_ref[...], w_ref[...], preferred_element_type=jnp.float32)
    acc = acc + b_ref[...]
    o_ref[...] = acc.astype(o_ref.dtype)


def efficient_patch_embed(x, dw_w, dw_b, pw_w, pw_b, patch_size, tile_n=256):
    """x: (B, C, H, W) NCHW.  Returns (B, E, H//P, W//P) NCHW."""
    B, C, H, W = x.shape
    P = patch_size
    E = pw_w.shape[0]
    assert H % P == 0 and W % P == 0
    Hp, Wp = H // P, W // P
    N = B * Hp * Wp
    K = C * P * P
    xdt = x.dtype

    # ---- XLA-side glue: patch extraction to a lane-dense (N, K) slab. ----
    xp = x.reshape(B, C, Hp, P, Wp, P)
    xp = xp.transpose(0, 2, 4, 1, 3, 5).reshape(N, K)   # row order = c*P*P + k

    # ---- Algebraic fusion of depthwise + pointwise into one (K, E) matmul. ----
    dw_w2 = dw_w.reshape(C, P * P).astype(jnp.float32)       # (C, P*P)
    pw_w2 = pw_w.reshape(E, C).astype(jnp.float32)           # (E, C)
    w_fused = (dw_w2[:, :, None] * pw_w2.T[:, None, :]).reshape(K, E)
    b_fused = (dw_b.astype(jnp.float32) @ pw_w2.T
               + pw_b.astype(jnp.float32)).reshape(1, E)

    # ---- Pad to MXU/lane-friendly shapes (zeros are exact no-ops). ----
    tile_n = max(8, _round_up(tile_n, 8))
    Kp = _round_up(K, 128)
    Ep = _round_up(E, 128)
    Np = _round_up(N, tile_n)

    xp = jnp.pad(xp, ((0, Np - N), (0, Kp - K)))
    w_fused = jnp.pad(w_fused, ((0, Kp - K), (0, Ep - E))).astype(xdt)
    b_fused = jnp.pad(b_fused, ((0, 0), (0, Ep - E)))        # stays f32

    grid = (Np // tile_n,)

    # VMEM budget: double-buffered x/out tiles + resident fused weights + slack.
    itemsize = jnp.dtype(xdt).itemsize
    vmem_bytes = (2 * tile_n * (Kp + Ep) * itemsize
                  + Kp * Ep * itemsize + Ep * 4) * 2 + (4 << 20)
    vmem_bytes = int(min(max(vmem_bytes, 16 << 20), 48 << 20))

    out = pl.pallas_call(
        _fused_patch_embed_kernel,
        out_shape=jax.ShapeDtypeStruct((Np, Ep), xdt),
        grid=grid,
        in_specs=[
            pl.BlockSpec((tile_n, Kp), lambda i: (i, 0)),
            pl.BlockSpec((Kp, Ep), lambda i: (0, 0)),   # constant -> weights stay resident
            pl.BlockSpec((1, Ep), lambda i: (0, 0)),
        ],
        out_specs=pl.BlockSpec((tile_n, Ep), lambda i: (i, 0)),
        compiler_params=pltpu.CompilerParams(
            dimension_semantics=("parallel",),
            vmem_limit_bytes=vmem_bytes),
    )(xp, w_fused, b_fused)

    # Slice off padding; back to NCHW: (N, E) -> (B, Hp, Wp, E) -> (B, E, Hp, Wp).
    out = out[:N, :E]
    return out.reshape(B, Hp, Wp, E).transpose(0, 3, 1, 2)


def reference_patch_embed(x, dw_w, dw_b, pw_w, pw_b, patch_size):
    """Plain-JAX reference mirroring the PyTorch module (NCHW convs)."""
    C = x.shape[1]
    y = lax.conv_general_dilated(
        x, dw_w, window_strides=(patch_size, patch_size), padding="VALID",
        feature_group_count=C,
        dimension_numbers=("NCHW", "OIHW", "NCHW"))
    y = y + dw_b.reshape(1, -1, 1, 1)
    z = lax.conv_general_dilated(
        y, pw_w, window_strides=(1, 1), padding="VALID",
        dimension_numbers=("NCHW", "OIHW", "NCHW"))
    z = z + pw_b.reshape(1, -1, 1, 1)
    return z


if __name__ == "__main__":
    # Small shapes consistent with the module: B=2, C=4, 16x16 image,
    # patch_size=4, embed_dim=32.
    B, C, H, W = 2, 4, 16, 16
    P = 4
    E = 32

    key = jax.random.PRNGKey(0)
    kx, kdw, kdb, kpw, kpb = jax.random.split(key, 5)

    x = jax.random.normal(kx, (B, C, H, W), dtype=jnp.float32)

    # Parameter shapes match nn.Conv2d:
    # depthwise: weight (C, 1, P, P), bias (C,)   [groups=C]
    # pointwise: weight (E, C, 1, 1), bias (E,)
    dw_w = jax.random.normal(kdw, (C, 1, P, P), dtype=jnp.float32) * (1.0 / (P * P))
    dw_b = jax.random.normal(kdb, (C,), dtype=jnp.float32) * 0.1
    pw_w = jax.random.normal(kpw, (E, C, 1, 1), dtype=jnp.float32) * (1.0 / C)
    pw_b = jax.random.normal(kpb, (E,), dtype=jnp.float32) * 0.1

    out = efficient_patch_embed(x, dw_w, dw_b, pw_w, pw_b, patch_size=P)
    out = jax.block_until_ready(out)

    ref = reference_patch_embed(x, dw_w, dw_b, pw_w, pw_b, patch_size=P)
    ref = jax.block_until_ready(ref)

    assert out.shape == (B, E, H // P, W // P), out.shape
    assert jnp.allclose(out, ref, atol=1e-4, rtol=1e-4), float(
        jnp.max(jnp.abs(out - ref)))

    print("KERNEL_OK")
</pallas_src>

<mosaic_0001>
module attributes {stable_mosaic.version = 11 : i64} {
  func.func @_fused_patch_embed_kernel(%arg0: i32, %arg1: memref<256x128xf32, #tpu.memory_space<vmem>>, %arg2: memref<128x128xf32, #tpu.memory_space<vmem>>, %arg3: memref<1x128xf32, #tpu.memory_space<vmem>>, %arg4: memref<256x128xf32, #tpu.memory_space<vmem>>) attributes {dimension_semantics = [#tpu.dimension_semantics<parallel>], iteration_bounds = array<i64: 1>, scalar_prefetch = 0 : i64, scratch_operands = 0 : i64, tpu.core_type = #tpu.core_type<tc>, window_params = [{transform_indices = @transform_0, window_bounds = array<i64: 256, 128>}, {pipeline_mode = #tpu.pipeline_mode<synchronous>, transform_indices = @transform_1, window_bounds = array<i64: 128, 128>}, {pipeline_mode = #tpu.pipeline_mode<synchronous>, transform_indices = @transform_2, window_bounds = array<i64: 1, 128>}, {transform_indices = @transform_3, window_bounds = array<i64: 256, 128>}]} {
    %c0 = arith.constant 0 : index
    %c0_0 = arith.constant 0 : index
    %0 = vector.load %arg1[%c0, %c0_0] : memref<256x128xf32, #tpu.memory_space<vmem>>, vector<256x128xf32>
    %c0_1 = arith.constant 0 : index
    %c0_2 = arith.constant 0 : index
    %1 = vector.load %arg2[%c0_1, %c0_2] : memref<128x128xf32, #tpu.memory_space<vmem>>, vector<128x128xf32>
    %cst = arith.constant dense<0.000000e+00> : vector<256x128xf32>
    %2 = tpu.matmul %0, %1, %cst {dimension_numbers = #tpu.dot_dimension_numbers<[1], [0], [0], [1], [0, 0, 1, 1], [], []>} : vector<256x128xf32>, vector<128x128xf32>, vector<256x128xf32> -> vector<256x128xf32>
    %c0_3 = arith.constant 0 : index
    %c0_4 = arith.constant 0 : index
    %3 = vector.load %arg3[%c0_3, %c0_4] : memref<1x128xf32, #tpu.memory_space<vmem>>, vector<1x128xf32>
    %4 = vector.broadcast %3 : vector<1x128xf32> to vector<256x128xf32>
    %5 = arith.addf %2, %4 : vector<256x128xf32>
    %c0_5 = arith.constant 0 : index
    %c0_6 = arith.constant 0 : index
    %6 = vector.load %arg4[%c0_5, %c0_6] : memref<256x128xf32, #tpu.memory_space<vmem>>, vector<256x128xf32>
    tpu.vector_store %arg4[%c0_5, %c0_6], %5 {strides = array<i32>} : memref<256x128xf32, #tpu.memory_space<vmem>>, vector<256x128xf32>,
    return
  }
  func.func @transform_0(%arg0: i32) -> (i32, i32) {
    %c0_i32 = arith.constant 0 : i32
    %c0_i32_0 = arith.constant 0 : i32
    return %arg0, %c0_i32 : i32, i32
  }
  func.func @transform_1(%arg0: i32) -> (i32, i32) {
    %c0_i32 = arith.constant 0 : i32
    %c0_i32_0 = arith.constant 0 : i32
    %c0_i32_1 = arith.constant 0 : i32
    return %c0_i32, %c0_i32_0 : i32, i32
  }
  func.func @transform_2(%arg0: i32) -> (i32, i32) {
    %c0_i32 = arith.constant 0 : i32
    %c0_i32_0 = arith.constant 0 : i32
    %c0_i32_1 = arith.constant 0 : i32
    return %c0_i32, %c0_i32_0 : i32, i32
  }
  func.func @transform_3(%arg0: i32) -> (i32, i32) {
    %c0_i32 = arith.constant 0 : i32
    %c0_i32_0 = arith.constant 0 : i32
    return %arg0, %c0_i32 : i32, i32
  }
}

</mosaic_0001>

<llo_original>
// kernel: tpu_custom_call.1
$region0: #{tpu_custom_call.1}
  #allocation0 [shape = 'u32[]', space=smem, size = 0x4, offset = 0x4, fixed_abs, tag = 'smem constant byte address 0x4 - core index']
  #allocation1 [shape = 'u32[144,128]{1,0:T(1,128)}', space=vmem, size = 0x12000, scoped, tag = 'internal scratch']
  %s0 = inlined_call_operand.hbm [shape: f32[256,128], index: 0, kind: input, shape index: {}]
  %s1 = inlined_call_operand.hbm [shape: f32[128,128], index: 1, kind: input, shape index: {}]
  %s2 = inlined_call_operand.vmem [shape: f32[1,128], index: 2, kind: input, shape index: {}]
  %s3 = inlined_call_operand.hbm [shape: f32[256,128], index: 3, kind: output, shape index: {}]
  %s4 = sld [smem:[#allocation0]]
  $region30: #{tpu_custom_call.1} parent=0
    _
  %s6 = ssub.s32 1, %s4
  %s7 = scalar_select 0, %s6, %s4
  $region1: #{tpu_custom_call.1} parent=0
    #allocation2 [shape = 'u8[131072]{0}', space=vmem, size = 0x20000, scoped, tag = 'input window, operand 0, single buffered']
    #allocation3 [shape = 's32[1]{0}', space=sflag, size = 0x4, scoped, tag = 'scoped memory for tpu_custom_call.1']
    #allocation4 [shape = 's32[1]{0}', space=sflag, size = 0x4, scoped, tag = 'scoped memory for tpu_custom_call.1']
    #allocation5 [shape = 'u8[65536]{0}', space=vmem, size = 0x10000, scoped, tag = 'input window, operand 1, single buffered']
    #allocation6 [shape = 's32[1]{0}', space=sflag, size = 0x4, scoped, tag = 'scoped memory for tpu_custom_call.1']
    #allocation7 [shape = 'u8[131072]{0}', space=vmem, size = 0x20000, scoped, tag = 'output window, operand 0, single buffered']
    %8 = vsyncpa [#allocation3], 0
    %9 = vsyncpa [#allocation6], 0
    %10 = vsyncpa [#allocation4], 0
    // Predicated region
    $region2: #{tpu_custom_call.1} parent=1 // pred_check
      _
    $region3: #{tpu_custom_call.1} parent=1 // pred_check_branch
      %12 = sbr.rel (0) target = $region5
    $region4: #{tpu_custom_call.1} parent=1 // pred_region
      %s14 = ssub.s32 4096, 4096
      %15 = vsyncadd [#allocation3], %s14
      %s16 = sshll.u32 [#allocation2], 4
      %s17 = int_to_ptr.vmem [resolvable:$true] %s16
      %22 = dma.hbm_to_vmem [thread:$0]  %s0, 4096, %s17, [#allocation3], 128, 128, 8
    $region5: #{tpu_custom_call.1} parent=1 // pred_fallthru
      _
    // Predicated region
    $region6: #{tpu_custom_call.1} parent=1 // pred_check
      _
    $region7: #{tpu_custom_call.1} parent=1 // pred_check_branch
      %24 = sbr.rel (0) target = $region9
    $region8: #{tpu_custom_call.1} parent=1 // pred_region
      %s26 = ssub.s32 2048, 2048
      %27 = vsyncadd [#allocation6], %s26
      %s28 = sshll.u32 [#allocation5], 4
      %s29 = int_to_ptr.vmem [resolvable:$true] %s28
      %34 = dma.hbm_to_vmem [thread:$0]  %s1, 2048, %s29, [#allocation6], 128, 128, 8
    $region9: #{tpu_custom_call.1} parent=1 // pred_fallthru
      _
    // Predicated region
    $region10: #{tpu_custom_call.1} parent=1 // pred_check
      _
    $region11: #{tpu_custom_call.1} parent=1 // pred_check_branch
      %36 = sbr.rel (0) target = $region13
    $region12: #{tpu_custom_call.1} parent=1 // pred_region
      _
    $region13: #{tpu_custom_call.1} parent=1 // pred_fallthru
      _
    // Predicated region
    $region14: #{tpu_custom_call.1} parent=1 // pred_check
      _
    $region15: #{tpu_custom_call.1} parent=1 // pred_check_branch
      %38 = sbr.rel (0) target = $region17
    $region16: #{tpu_custom_call.1} parent=1 // pred_region
      %39 = dma.done [#allocation3], 4096
    $region17: #{tpu_custom_call.1} parent=1 // pred_fallthru
      _
    // Predicated region
    $region18: #{tpu_custom_call.1} parent=1 // pred_check
      _
    $region19: #{tpu_custom_call.1} parent=1 // pred_check_branch
      %41 = sbr.rel (0) target = $region21
    $region20: #{tpu_custom_call.1} parent=1 // pred_region
      %42 = dma.done [#allocation6], 2048
    $region21: #{tpu_custom_call.1} parent=1 // pred_fallthru
      _
    %v43 = vld [vmem:[#allocation2] sm:$0xff]
    %v44 = vld [vmem:[#allocation2 + $0x8] sm:$0xff]
    %v45 = vld [vmem:[#allocation2 + $0x10] sm:$0xff]
    %v46 = vld [vmem:[#allocation2 + $0x18] sm:$0xff]
    %v47 = vld [vmem:[#allocation2 + $0x20] sm:$0xff]
    %v48 = vld [vmem:[#allocation2 + $0x28] sm:$0xff]
    %v49 = vld [vmem:[#allocation2 + $0x30] sm:$0xff]
    %v50 = vld [vmem:[#allocation2 + $0x38] sm:$0xff]
    %v51 = vld [vmem:[#allocation2 + $0x40] sm:$0xff]
    %v52 = vld [vmem:[#allocation2 + $0x48] sm:$0xff]
    %v53 = vld [vmem:[#allocation2 + $0x50] sm:$0xff]
    %v54 = vld [vmem:[#allocation2 + $0x58] sm:$0xff]
    %v55 = vld [vmem:[#allocation2 + $0x60] sm:$0xff]
    %v56 = vld [vmem:[#allocation2 + $0x68] sm:$0xff]
    %v57 = vld [vmem:[#allocation2 + $0x70] sm:$0xff]
    %v58 = vld [vmem:[#allocation2 + $0x78] sm:$0xff]
    %v59 = vld [vmem:[#allocation2 + $0x80] sm:$0xff]
    %v60 = vld [vmem:[#allocation2 + $0x88] sm:$0xff]
    %v61 = vld [vmem:[#allocation2 + $0x90] sm:$0xff]
    %v62 = vld [vmem:[#allocation2 + $0x98] sm:$0xff]
    %v63 = vld [vmem:[#allocation2 + $0xa0] sm:$0xff]
    %v64 = vld [vmem:[#allocation2 + $0xa8] sm:$0xff]
    %v65 = vld [vmem:[#allocation2 + $0xb0] sm:$0xff]
    %v66 = vld [vmem:[#allocation2 + $0xb8] sm:$0xff]
    %v67 = vld [vmem:[#allocation2 + $0xc0] sm:$0xff]
    %v68 = vld [vmem:[#allocation2 + $0xc8] sm:$0xff]
    %v69 = vld [vmem:[#allocation2 + $0xd0] sm:$0xff]
    %v70 = vld [vmem:[#allocation2 + $0xd8] sm:$0xff]
    %v71 = vld [vmem:[#allocation2 + $0xe0] sm:$0xff]
    %v72 = vld [vmem:[#allocation2 + $0xe8] sm:$0xff]
    %v73 = vld [vmem:[#allocation2 + $0xf0] sm:$0xff]
    %v74 = vld [vmem:[#allocation2 + $0xf8] sm:$0xff]
    %v75 = vld [vmem:[#allocation5] sm:$0xff]
    %v76 = vld [vmem:[#allocation5 + $0x8] sm:$0xff]
    %v77 = vld [vmem:[#allocation5 + $0x10] sm:$0xff]
    %v78 = vld [vmem:[#allocation5 + $0x18] sm:$0xff]
    %v79 = vld [vmem:[#allocation5 + $0x20] sm:$0xff]
    %v80 = vld [vmem:[#allocation5 + $0x28] sm:$0xff]
    %v81 = vld [vmem:[#allocation5 + $0x30] sm:$0xff]
    %v82 = vld [vmem:[#allocation5 + $0x38] sm:$0xff]
    %v83 = vld [vmem:[#allocation5 + $0x40] sm:$0xff]
    %v84 = vld [vmem:[#allocation5 + $0x48] sm:$0xff]
    %v85 = vld [vmem:[#allocation5 + $0x50] sm:$0xff]
    %v86 = vld [vmem:[#allocation5 + $0x58] sm:$0xff]
    %v87 = vld [vmem:[#allocation5 + $0x60] sm:$0xff]
    %v88 = vld [vmem:[#allocation5 + $0x68] sm:$0xff]
    %v89 = vld [vmem:[#allocation5 + $0x70] sm:$0xff]
    %v90 = vld [vmem:[#allocation5 + $0x78] sm:$0xff]
    %v91 = vld [vmem:[%s2] sm:$0x1]
    %v93 = vlaneseq
    %v94 = vshrl.u32 %v93, 7
    %v95 = vsub.s32 0, %v94
    %v96 = vrot.slane %v91, %v95
    %98 = vmatprep.subr.mxu0 0.0
    %99 = vmatpush1.msra.mxu0 %v90
    %100 = vmatprep.subr.mxu0 0.0
    %101 = vmatpush1.msra.mxu0 %v89
    %102 = vmatprep.subr.mxu0 0.0
    %103 = vmatpush1.msra.mxu0 %v88
    %104 = vmatprep.subr.mxu0 0.0
    %105 = vmatpush1.msra.mxu0 %v87
    %106 = vmatprep.subr.mxu0 0.0
    %107 = vmatpush1.msra.mxu0 %v86
    %108 = vmatprep.subr.mxu0 0.0
    %109 = vmatpush1.msra.mxu0 %v85
    %110 = vmatprep.subr.mxu0 0.0
    %111 = vmatpush1.msra.mxu0 %v84
    %112 = vmatprep.subr.mxu0 0.0
    %113 = vmatpush1.msra.mxu0 %v83
    %114 = vmatprep.subr.mxu0 0.0
    %115 = vmatpush1.msra.mxu0 %v82
    %116 = vmatprep.subr.mxu0 0.0
    %117 = vmatpush1.msra.mxu0 %v81
    %118 = vmatprep.subr.mxu0 0.0
    %119 = vmatpush1.msra.mxu0 %v80
    %120 = vmatprep.subr.mxu0 0.0
    %121 = vmatpush1.msra.mxu0 %v79
    %122 = vmatprep.subr.mxu0 0.0
    %123 = vmatpush1.msra.mxu0 %v78
    %124 = vmatprep.subr.mxu0 0.0
    %125 = vmatpush1.msra.mxu0 %v77
    %126 = vmatprep.subr.mxu0 0.0
    %127 = vmatpush1.msra.mxu0 %v76
    %128 = vmatprep.subr.mxu0 0.0
    %129 = vmatpush1.msra.mxu0 %v75
    %130 = vmatprep.subr.mxu0 0.0
    %131 = vmatpush2.msra.mxu0 0.0
    %132 = vmatprep.subr.mxu0 0.0
    %133 = vmatpush2.msra.mxu0 0.0
    %134 = vmatprep.subr.mxu0 0.0
    %135 = vmatpush2.msra.mxu0 0.0
    %136 = vmatprep.subr.mxu0 0.0
    %137 = vmatpush2.msra.mxu0 0.0
    %138 = vmatprep.subr.mxu0 0.0
    %139 = vmatpush2.msra.mxu0 0.0
    %140 = vmatprep.subr.mxu0 0.0
    %141 = vmatpush2.msra.mxu0 0.0
    %142 = vmatprep.subr.mxu0 0.0
    %143 = vmatpush2.msra.mxu0 0.0
    %144 = vmatprep.subr.mxu0 0.0
    %145 = vmatpush2.msra.mxu0 0.0
    %146 = vmatprep.subr.mxu0 0.0
    %147 = vmatpush2.msra.mxu0 0.0
    %148 = vmatprep.subr.mxu0 0.0
    %149 = vmatpush2.msra.mxu0 0.0
    %150 = vmatprep.subr.mxu0 0.0
    %151 = vmatpush2.msra.mxu0 0.0
    %152 = vmatprep.subr.mxu0 0.0
    %153 = vmatpush2.msra.mxu0 0.0
    %154 = vmatprep.subr.mxu0 0.0
    %155 = vmatpush2.msra.mxu0 0.0
    %156 = vmatprep.subr.mxu0 0.0
    %157 = vmatpush2.msra.mxu0 0.0
    %158 = vmatprep.subr.mxu0 0.0
    %159 = vmatpush2.msra.mxu0 0.0
    %160 = vmatprep.subr.mxu0 0.0
    %161 = vmatpush2.msra.mxu0 0.0
    %162 = vmatprep.mubr.f32.mxu0 0.0
    %163 = vmatmul.mubr.f32.gmra.mxu0 %v43
    %v164 = vpop.f32.mrf.mxu0
    %v165 = vadd.f32 %v96, %v164
    %v166 = vpop.f32.mrf.mxu0
    %167 = vmatprep.mubr.f32.mxu0 0.0
    %168 = vmatmul.mubr.f32.gmra.mxu0 %v44
    %v169 = vpop.f32.mrf.mxu0
    %v170 = vadd.f32 %v96, %v169
    %v171 = vpop.f32.mrf.mxu0
    %172 = vmatprep.mubr.f32.mxu0 0.0
    %173 = vmatmul.mubr.f32.gmra.mxu0 %v45
    %v174 = vpop.f32.mrf.mxu0
    %v175 = vadd.f32 %v96, %v174
    %v176 = vpop.f32.mrf.mxu0
    %177 = vmatprep.mubr.f32.mxu0 0.0
    %178 = vmatmul.mubr.f32.gmra.mxu0 %v46
    %v179 = vpop.f32.mrf.mxu0
    %v180 = vadd.f32 %v96, %v179
    %v181 = vpop.f32.mrf.mxu0
    %182 = vmatprep.mubr.f32.mxu0 0.0
    %183 = vmatmul.mubr.f32.gmra.mxu0 %v47
    %v184 = vpop.f32.mrf.mxu0
    %v185 = vadd.f32 %v96, %v184
    %v186 = vpop.f32.mrf.mxu0
    %187 = vmatprep.mubr.f32.mxu0 0.0
    %188 = vmatmul.mubr.f32.gmra.mxu0 %v48
    %v189 = vpop.f32.mrf.mxu0
    %v190 = vadd.f32 %v96, %v189
    %v191 = vpop.f32.mrf.mxu0
    %192 = vmatprep.mubr.f32.mxu0 0.0
    %193 = vmatmul.mubr.f32.gmra.mxu0 %v49
    %v194 = vpop.f32.mrf.mxu0
    %v195 = vadd.f32 %v96, %v194
    %v196 = vpop.f32.mrf.mxu0
    %197 = vmatprep.mubr.f32.mxu0 0.0
    %198 = vmatmul.mubr.f32.gmra.mxu0 %v50
    %v199 = vpop.f32.mrf.mxu0
    %v200 = vadd.f32 %v96, %v199
    %v201 = vpop.f32.mrf.mxu0
    %202 = vmatprep.mubr.f32.mxu0 0.0
    %203 = vmatmul.mubr.f32.gmra.mxu0 %v51
    %v204 = vpop.f32.mrf.mxu0
    %v205 = vadd.f32 %v96, %v204
    %v206 = vpop.f32.mrf.mxu0
    %207 = vmatprep.mubr.f32.mxu0 0.0
    %208 = vmatmul.mubr.f32.gmra.mxu0 %v52
    %v209 = vpop.f32.mrf.mxu0
    %v210 = vadd.f32 %v96, %v209
    %v211 = vpop.f32.mrf.mxu0
    %212 = vmatprep.mubr.f32.mxu0 0.0
    %213 = vmatmul.mubr.f32.gmra.mxu0 %v53
    %v214 = vpop.f32.mrf.mxu0
    %v215 = vadd.f32 %v96, %v214
    %v216 = vpop.f32.mrf.mxu0
    %217 = vmatprep.mubr.f32.mxu0 0.0
    %218 = vmatmul.mubr.f32.gmra.mxu0 %v54
    %v219 = vpop.f32.mrf.mxu0
    %v220 = vadd.f32 %v96, %v219
    %v221 = vpop.f32.mrf.mxu0
    %222 = vmatprep.mubr.f32.mxu0 0.0
    %223 = vmatmul.mubr.f32.gmra.mxu0 %v55
    %v224 = vpop.f32.mrf.mxu0
    %v225 = vadd.f32 %v96, %v224
    %v226 = vpop.f32.mrf.mxu0
    %227 = vmatprep.mubr.f32.mxu0 0.0
    %228 = vmatmul.mubr.f32.gmra.mxu0 %v56
    %v229 = vpop.f32.mrf.mxu0
    %v230 = vadd.f32 %v96, %v229
    %v231 = vpop.f32.mrf.mxu0
    %232 = vmatprep.mubr.f32.mxu0 0.0
    %233 = vmatmul.mubr.f32.gmra.mxu0 %v57
    %v234 = vpop.f32.mrf.mxu0
    %v235 = vadd.f32 %v96, %v234
    %v236 = vpop.f32.mrf.mxu0
    %237 = vmatprep.mubr.f32.mxu0 0.0
    %238 = vmatmul.mubr.f32.gmra.mxu0 %v58
    %v239 = vpop.f32.mrf.mxu0
    %v240 = vadd.f32 %v96, %v239
    %v241 = vpop.f32.mrf.mxu0
    %242 = vmatprep.mubr.f32.mxu0 0.0
    %243 = vmatmul.mubr.f32.gmra.mxu0 %v59
    %v244 = vpop.f32.mrf.mxu0
    %v245 = vadd.f32 %v96, %v244
    %v246 = vpop.f32.mrf.mxu0
    %247 = vmatprep.mubr.f32.mxu0 0.0
    %248 = vmatmul.mubr.f32.gmra.mxu0 %v60
    %v249 = vpop.f32.mrf.mxu0
    %v250 = vadd.f32 %v96, %v249
    %v251 = vpop.f32.mrf.mxu0
    %252 = vmatprep.mubr.f32.mxu0 0.0
    %253 = vmatmul.mubr.f32.gmra.mxu0 %v61
    %v254 = vpop.f32.mrf.mxu0
    %v255 = vadd.f32 %v96, %v254
    %v256 = vpop.f32.mrf.mxu0
    %257 = vmatprep.mubr.f32.mxu0 0.0
    %258 = vmatmul.mubr.f32.gmra.mxu0 %v62
    %v259 = vpop.f32.mrf.mxu0
    %v260 = vadd.f32 %v96, %v259
    %v261 = vpop.f32.mrf.mxu0
    %262 = vmatprep.mubr.f32.mxu0 0.0
    %263 = vmatmul.mubr.f32.gmra.mxu0 %v63
    %v264 = vpop.f32.mrf.mxu0
    %v265 = vadd.f32 %v96, %v264
    %v266 = vpop.f32.mrf.mxu0
    %267 = vmatprep.mubr.f32.mxu0 0.0
    %268 = vmatmul.mubr.f32.gmra.mxu0 %v64
    %v269 = vpop.f32.mrf.mxu0
    %v270 = vadd.f32 %v96, %v269
    %v271 = vpop.f32.mrf.mxu0
    %272 = vmatprep.mubr.f32.mxu0 0.0
    %273 = vmatmul.mubr.f32.gmra.mxu0 %v65
    %v274 = vpop.f32.mrf.mxu0
    %v275 = vadd.f32 %v96, %v274
    %v276 = vpop.f32.mrf.mxu0
    %277 = vmatprep.mubr.f32.mxu0 0.0
    %278 = vmatmul.mubr.f32.gmra.mxu0 %v66
    %v279 = vpop.f32.mrf.mxu0
    %v280 = vadd.f32 %v96, %v279
    %v281 = vpop.f32.mrf.mxu0
    %282 = vmatprep.mubr.f32.mxu0 0.0
    %283 = vmatmul.mubr.f32.gmra.mxu0 %v67
    %v284 = vpop.f32.mrf.mxu0
    %v285 = vadd.f32 %v96, %v284
    %v286 = vpop.f32.mrf.mxu0
    %287 = vmatprep.mubr.f32.mxu0 0.0
    %288 = vmatmul.mubr.f32.gmra.mxu0 %v68
    %v289 = vpop.f32.mrf.mxu0
    %v290 = vadd.f32 %v96, %v289
    %v291 = vpop.f32.mrf.mxu0
    %292 = vmatprep.mubr.f32.mxu0 0.0
    %293 = vmatmul.mubr.f32.gmra.mxu0 %v69
    %v294 = vpop.f32.mrf.mxu0
    %v295 = vadd.f32 %v96, %v294
    %v296 = vpop.f32.mrf.mxu0
    %297 = vmatprep.mubr.f32.mxu0 0.0
    %298 = vmatmul.mubr.f32.gmra.mxu0 %v70
    %v299 = vpop.f32.mrf.mxu0
    %v300 = vadd.f32 %v96, %v299
    %v301 = vpop.f32.mrf.mxu0
    %302 = vmatprep.mubr.f32.mxu0 0.0
    %303 = vmatmul.mubr.f32.gmra.mxu0 %v71
    %v304 = vpop.f32.mrf.mxu0
    %v305 = vadd.f32 %v96, %v304
    %v306 = vpop.f32.mrf.mxu0
    %307 = vmatprep.mubr.f32.mxu0 0.0
    %308 = vmatmul.mubr.f32.gmra.mxu0 %v72
    %v309 = vpop.f32.mrf.mxu0
    %v310 = vadd.f32 %v96, %v309
    %v311 = vpop.f32.mrf.mxu0
    %312 = vmatprep.mubr.f32.mxu0 0.0
    %313 = vmatmul.mubr.f32.gmra.mxu0 %v73
    %v314 = vpop.f32.mrf.mxu0
    %v315 = vadd.f32 %v96, %v314
    %v316 = vpop.f32.mrf.mxu0
    %317 = vmatprep.mubr.f32.mxu0 0.0
    %318 = vmatmul.mubr.f32.gmra.mxu0 %v74
    %v319 = vpop.f32.mrf.mxu0
    %v320 = vadd.f32 %v96, %v319
    %v321 = vpop.f32.mrf.mxu0
    %322 = vdwg.mxu0
    %323 = vst [vmem:[#allocation7] sm:$0xff] %v165
    %324 = vst [vmem:[#allocation7 + $0x8] sm:$0xff] %v170
    %325 = vst [vmem:[#allocation7 + $0x10] sm:$0xff] %v175
    %326 = vst [vmem:[#allocation7 + $0x18] sm:$0xff] %v180
    %327 = vst [vmem:[#allocation7 + $0x20] sm:$0xff] %v185
    %328 = vst [vmem:[#allocation7 + $0x28] sm:$0xff] %v190
    %329 = vst [vmem:[#allocation7 + $0x30] sm:$0xff] %v195
    %330 = vst [vmem:[#allocation7 + $0x38] sm:$0xff] %v200
    %331 = vst [vmem:[#allocation7 + $0x40] sm:$0xff] %v205
    %332 = vst [vmem:[#allocation7 + $0x48] sm:$0xff] %v210
    %333 = vst [vmem:[#allocation7 + $0x50] sm:$0xff] %v215
    %334 = vst [vmem:[#allocation7 + $0x58] sm:$0xff] %v220
    %335 = vst [vmem:[#allocation7 + $0x60] sm:$0xff] %v225
    %336 = vst [vmem:[#allocation7 + $0x68] sm:$0xff] %v230
    %337 = vst [vmem:[#allocation7 + $0x70] sm:$0xff] %v235
    %338 = vst [vmem:[#allocation7 + $0x78] sm:$0xff] %v240
    %339 = vst [vmem:[#allocation7 + $0x80] sm:$0xff] %v245
    %340 = vst [vmem:[#allocation7 + $0x88] sm:$0xff] %v250
    %341 = vst [vmem:[#allocation7 + $0x90] sm:$0xff] %v255
    %342 = vst [vmem:[#allocation7 + $0x98] sm:$0xff] %v260
    %343 = vst [vmem:[#allocation7 + $0xa0] sm:$0xff] %v265
    %344 = vst [vmem:[#allocation7 + $0xa8] sm:$0xff] %v270
    %345 = vst [vmem:[#allocation7 + $0xb0] sm:$0xff] %v275
    %346 = vst [vmem:[#allocation7 + $0xb8] sm:$0xff] %v280
    %347 = vst [vmem:[#allocation7 + $0xc0] sm:$0xff] %v285
    %348 = vst [vmem:[#allocation7 + $0xc8] sm:$0xff] %v290
    %349 = vst [vmem:[#allocation7 + $0xd0] sm:$0xff] %v295
    %350 = vst [vmem:[#allocation7 + $0xd8] sm:$0xff] %v300
    %351 = vst [vmem:[#allocation7 + $0xe0] sm:$0xff] %v305
    %352 = vst [vmem:[#allocation7 + $0xe8] sm:$0xff] %v310
    %353 = vst [vmem:[#allocation7 + $0xf0] sm:$0xff] %v315
    %354 = vst [vmem:[#allocation7 + $0xf8] sm:$0xff] %v320
    // Predicated region
    $region22: #{tpu_custom_call.1} parent=1 // pred_check
      _
    $region23: #{tpu_custom_call.1} parent=1 // pred_check_branch
      %356 = sbr.rel (0) target = $region25
    $region24: #{tpu_custom_call.1} parent=1 // pred_region
      %s358 = ssub.s32 4096, 4096
      %359 = vsyncadd [#allocation4], %s358
      %s360 = sshll.u32 [#allocation7], 4
      %s361 = int_to_ptr.vmem [resolvable:$true] %s360
      %366 = dma.vmem_to_hbm [thread:$0]  %s361, 4096, %s3, [#allocation4], 128, 128, 8
    $region25: #{tpu_custom_call.1} parent=1 // pred_fallthru
      _
    // Predicated region
    $region26: #{tpu_custom_call.1} parent=1 // pred_check
      _
    $region27: #{tpu_custom_call.1} parent=1 // pred_check_branch
      %368 = sbr.rel (0) target = $region29
    $region28: #{tpu_custom_call.1} parent=1 // pred_region
      %369 = dma.done [#allocation4], 4096
    $region29: #{tpu_custom_call.1} parent=1 // pred_fallthru
      _
    %370 = vsyncpa [#allocation3], 1
    %371 = vsyncpa [#allocation6], 1
    %372 = vsyncpa [#allocation4], 1

</llo_original>
